<compile_context>
chip_gen: v5e
topology: v5e:2x2
jax: 0.10.0
libtpu: 0.0.40
codegen_flags: <defaults>
</compile_context>

<pallas_src>
import functools

import jax
import jax.numpy as jnp
from jax.experimental import pallas as pl
from jax.experimental.pallas import tpu as pltpu


# ----------------------------------------------------------------------------
# Fused Pallas kernel: whole MLP forward for one row-tile of (batch*steps).
# ----------------------------------------------------------------------------
def _fused_mlp_kernel(*refs, n_hidden: int, has_exog: bool, has_readout: bool,
                      compute_dtype):
    it = iter(refs)
    x_ref = next(it)                                   # (TBS, N, F)
    u_ref = next(it) if has_exog else None             # (TBS, Fu)
    wx_ref = next(it)                                  # (F, H)
    wu_ref = next(it) if has_exog else None            # (Fu, H)
    b1_ref = next(it)                                  # (1, H)
    hidden = [(next(it), next(it)) for _ in range(n_hidden - 1)]   # (H,H),(1,H)
    readout = (next(it), next(it)) if has_readout else None        # (H,O),(1,O)
    o_ref = next(it)                                   # (TBS, N, O)

    TBS, N, F = x_ref.shape
    H = b1_ref.shape[-1]
    M = TBS * N

    # --- first layer: split-matmul replaces the exog concat -------------------
    x = x_ref[...].reshape(M, F).astype(compute_dtype)
    h = jnp.dot(x, wx_ref[...].astype(compute_dtype),
                preferred_element_type=jnp.float32)              # (M, H) f32
    if has_exog:
        u = u_ref[...].astype(compute_dtype)                     # (TBS, Fu)
        hu = jnp.dot(u, wu_ref[...].astype(compute_dtype),
                     preferred_element_type=jnp.float32)         # (TBS, H)
        # broadcast the per-(batch,step) exog contribution over the node axis
        h = (h.reshape(TBS, N, H) + hu[:, None, :]).reshape(M, H)
    h = jnp.maximum(h + b1_ref[...], 0.0)                        # bias+ReLU, f32

    # --- remaining hidden Dense layers (Linear + ReLU) ------------------------
    for w_ref, b_ref in hidden:
        h = jnp.dot(h.astype(compute_dtype), w_ref[...].astype(compute_dtype),
                    preferred_element_type=jnp.float32)
        h = jnp.maximum(h + b_ref[...], 0.0)

    # --- optional linear readout (no activation) ------------------------------
    if has_readout:
        wr_ref, br_ref = readout
        h = jnp.dot(h.astype(compute_dtype), wr_ref[...].astype(compute_dtype),
                    preferred_element_type=jnp.float32) + br_ref[...]

    o_ref[...] = h.reshape(TBS, N, -1).astype(o_ref.dtype)


# ----------------------------------------------------------------------------
# Parameter init (deterministic, mirrors nn.Linear shapes; W stored as (in,out))
# ----------------------------------------------------------------------------
def init_mlp_params(key, input_size, hidden_size, output_size, exog_size,
                    n_layers, dtype=jnp.float32):
    if exog_size is not None:
        input_size = input_size + exog_size
    params = {"layers": [], "readout": None}
    in_dim = input_size
    for _ in range(n_layers):
        key, kw, kb = jax.random.split(key, 3)
        bound = 1.0 / jnp.sqrt(in_dim)
        w = jax.random.uniform(kw, (in_dim, hidden_size), dtype, -bound, bound)
        b = jax.random.uniform(kb, (hidden_size,), dtype, -bound, bound)
        params["layers"].append((w, b))
        in_dim = hidden_size
    if output_size is not None:
        key, kw, kb = jax.random.split(key, 3)
        bound = 1.0 / jnp.sqrt(hidden_size)
        w = jax.random.uniform(kw, (hidden_size, output_size), dtype, -bound, bound)
        b = jax.random.uniform(kb, (output_size,), dtype, -bound, bound)
        params["readout"] = (w, b)
    return params


# ----------------------------------------------------------------------------
# Glue: exog handling identical to maybe_cat_exog/expand_then_cat
# ----------------------------------------------------------------------------
def maybe_cat_exog_jax(x, u, dim=-1):
    """x: (B, S, N, F); u: None | (B, S, Fu) | (B, S, N, Fu)."""
    if u is None:
        return x
    if u.ndim == 3:
        u = u[:, :, None, :]                     # 'b s f -> b s 1 f'
    B = max(x.shape[0], u.shape[0])
    S = max(x.shape[1], u.shape[1])
    N = max(x.shape[2], u.shape[2])
    x = jnp.broadcast_to(x, (B, S, N, x.shape[-1]))
    u = jnp.broadcast_to(u, (B, S, N, u.shape[-1]))
    return jnp.concatenate([x, u], axis=dim)


# ----------------------------------------------------------------------------
# Forward pass (matches MLP.forward semantics; dropout=0 -> identity)
# ----------------------------------------------------------------------------
def mlp_forward(params, x, u=None, *, tbs=256, compute_dtype=jnp.float32):
    B, S, N, F_in = x.shape

    # Node-level (4-D) exog: rare path — fold into x via broadcast+concat in the
    # wrapper and run the same fused kernel with no separate u input.
    if u is not None and u.ndim == 4:
        x = maybe_cat_exog_jax(x, u)
        u = None
        B, S, N, F_in = x.shape

    has_exog = u is not None
    w1, b1 = params["layers"][0]
    if has_exog:
        Fu = u.shape[-1]
        assert w1.shape[0] == F_in + Fu, (w1.shape, F_in, Fu)
        wx, wu = w1[:F_in], w1[F_in:]            # split first-layer weight
        u2 = jnp.broadcast_to(u, (B, S, Fu)).reshape(B * S, Fu)
    else:
        assert w1.shape[0] == F_in, (w1.shape, F_in)
        wx, wu, u2 = w1, None, None

    BS = B * S
    x3 = x.reshape(BS, N, F_in)

    # Row-tile over the (batch*steps) axis. Keep the u-block sublane dimension
    # aligned: tbs == BS (full extent) or a multiple of 8.
    tbs = min(tbs, BS)
    if tbs != BS:
        tbs = max(8, (tbs // 8) * 8)
    grid = (pl.cdiv(BS, tbs),)

    n_hidden = len(params["layers"])
    has_readout = params["readout"] is not None
    H = b1.shape[-1]
    out_feat = params["readout"][1].shape[-1] if has_readout else H

    operands = [x3]
    in_specs = [pl.BlockSpec((tbs, N, F_in), lambda i: (i, 0, 0))]
    if has_exog:
        operands.append(u2)
        in_specs.append(pl.BlockSpec((tbs, Fu), lambda i: (i, 0)))

    def add_full(arr):
        # Full-extent block with a constant index -> DMA'd once, VMEM-resident.
        zeros = (0,) * arr.ndim
        operands.append(arr)
        in_specs.append(pl.BlockSpec(arr.shape, lambda i, z=zeros: z))

    add_full(wx)
    if has_exog:
        add_full(wu)
    add_full(b1.reshape(1, H))
    for w, b in params["layers"][1:]:
        add_full(w)
        add_full(b.reshape(1, -1))
    if has_readout:
        wr, br = params["readout"]
        add_full(wr)
        add_full(br.reshape(1, -1))

    kernel = functools.partial(
        _fused_mlp_kernel, n_hidden=n_hidden, has_exog=has_exog,
        has_readout=has_readout, compute_dtype=compute_dtype)

    # TODO(synk): output last dim (output_size=16) is lane-sparse; padding to
    # 128 or transposing the store would densify it but bloat/relayout HBM for
    # this semantic shape, so it is left natural here.
    out3 = pl.pallas_call(
        kernel,
        out_shape=jax.ShapeDtypeStruct((BS, N, out_feat), x.dtype),
        grid_spec=pl.GridSpec(
            grid=grid,
            in_specs=in_specs,
            out_specs=pl.BlockSpec((tbs, N, out_feat), lambda i: (i, 0, 0)),
        ),
        compiler_params=pltpu.CompilerParams(
            dimension_semantics=("parallel",)),      # shard rows across TCs (v7x)
    )(*operands)

    return out3.reshape(B, S, N, out_feat)


# ----------------------------------------------------------------------------
if __name__ == "__main__":
    # Module hyper-parameters (small, consistent with the forward).
    input_size, hidden_size, output_size = 4, 32, 16
    exog_size, n_layers = 3, 2
    B, S, N = 2, 8, 4   # batch, steps, nodes

    key = jax.random.PRNGKey(0)
    kp, kx, ku = jax.random.split(key, 3)

    params = init_mlp_params(kp, input_size, hidden_size, output_size,
                             exog_size, n_layers)

    x = jax.random.normal(kx, (B, S, N, input_size), jnp.float32)
    u = jax.random.normal(ku, (B, S, exog_size), jnp.float32)

    # f32 path (tbs=8 -> 2-step pipelined grid on the batch*steps axis).
    out = mlp_forward(params, x, u, tbs=8)
    out = jax.block_until_ready(out)

    # Pure-JAX reference (concat path) for a sanity check of the fused kernel.
    def ref_forward(params, x, u):
        h = maybe_cat_exog_jax(x, u)
        lead = h.shape[:-1]
        h = h.reshape(-1, h.shape[-1])
        for w, b in params["layers"]:
            h = jnp.maximum(h @ w + b, 0.0)
        if params["readout"] is not None:
            w, b = params["readout"]
            h = h @ w + b
        return h.reshape(*lead, h.shape[-1])

    ref = ref_forward(params, x, u)
    assert out.shape == (B, S, N, output_size), out.shape
    assert jnp.allclose(out, ref, atol=1e-5, rtol=1e-5), "mismatch vs reference"

    # bf16 MXU-input / f32-accumulate path (recommended on v6e/v7x).
    out_bf16 = jax.block_until_ready(
        mlp_forward(params, x, u, tbs=8, compute_dtype=jnp.bfloat16))
    assert out_bf16.shape == (B, S, N, output_size), out_bf16.shape
    assert bool(jnp.all(jnp.isfinite(out_bf16)))
    assert jnp.allclose(out_bf16, ref, atol=1e-1, rtol=1e-1), "bf16 path diverged"

    print("KERNEL_OK")
</pallas_src>

<mosaic_0001>
module attributes {stable_mosaic.version = 11 : i64} {
  func.func @_fused_mlp_kernel(%arg0: i32, %arg1: memref<8x4x4xf32, #tpu.memory_space<vmem>>, %arg2: memref<8x3xf32, #tpu.memory_space<vmem>>, %arg3: memref<4x32xf32, #tpu.memory_space<vmem>>, %arg4: memref<3x32xf32, #tpu.memory_space<vmem>>, %arg5: memref<1x32xf32, #tpu.memory_space<vmem>>, %arg6: memref<32x32xf32, #tpu.memory_space<vmem>>, %arg7: memref<1x32xf32, #tpu.memory_space<vmem>>, %arg8: memref<32x16xf32, #tpu.memory_space<vmem>>, %arg9: memref<1x16xf32, #tpu.memory_space<vmem>>, %arg10: memref<8x4x16xf32, #tpu.memory_space<vmem>>) attributes {dimension_semantics = [#tpu.dimension_semantics<parallel>], iteration_bounds = array<i64: 2>, scalar_prefetch = 0 : i64, scratch_operands = 0 : i64, tpu.core_type = #tpu.core_type<tc>, window_params = [{transform_indices = @transform_0, window_bounds = array<i64: 8, 4, 4>}, {transform_indices = @transform_1, window_bounds = array<i64: 8, 3>}, {pipeline_mode = #tpu.pipeline_mode<synchronous>, transform_indices = @transform_2, window_bounds = array<i64: 4, 32>}, {pipeline_mode = #tpu.pipeline_mode<synchronous>, transform_indices = @transform_3, window_bounds = array<i64: 3, 32>}, {pipeline_mode = #tpu.pipeline_mode<synchronous>, transform_indices = @transform_4, window_bounds = array<i64: 1, 32>}, {pipeline_mode = #tpu.pipeline_mode<synchronous>, transform_indices = @transform_5, window_bounds = array<i64: 32, 32>}, {pipeline_mode = #tpu.pipeline_mode<synchronous>, transform_indices = @transform_6, window_bounds = array<i64: 1, 32>}, {pipeline_mode = #tpu.pipeline_mode<synchronous>, transform_indices = @transform_7, window_bounds = array<i64: 32, 16>}, {pipeline_mode = #tpu.pipeline_mode<synchronous>, transform_indices = @transform_8, window_bounds = array<i64: 1, 16>}, {transform_indices = @transform_9, window_bounds = array<i64: 8, 4, 16>}]} {
    %c0 = arith.constant 0 : index
    %c0_0 = arith.constant 0 : index
    %c0_1 = arith.constant 0 : index
    %0 = vector.load %arg1[%c0, %c0_0, %c0_1] : memref<8x4x4xf32, #tpu.memory_space<vmem>>, vector<8x4x4xf32>
    %1 = vector.shape_cast %0 : vector<8x4x4xf32> to vector<32x4xf32>
    %c0_2 = arith.constant 0 : index
    %c0_3 = arith.constant 0 : index
    %2 = vector.load %arg3[%c0_2, %c0_3] : memref<4x32xf32, #tpu.memory_space<vmem>>, vector<4x32xf32>
    %cst = arith.constant dense<0.000000e+00> : vector<32x32xf32>
    %3 = tpu.matmul %1, %2, %cst {dimension_numbers = #tpu.dot_dimension_numbers<[1], [0], [0], [1], [0, 0, 1, 1], [], []>} : vector<32x4xf32>, vector<4x32xf32>, vector<32x32xf32> -> vector<32x32xf32>
    %c0_4 = arith.constant 0 : index
    %c0_5 = arith.constant 0 : index
    %4 = vector.load %arg2[%c0_4, %c0_5] : memref<8x3xf32, #tpu.memory_space<vmem>>, vector<8x3xf32>
    %c0_6 = arith.constant 0 : index
    %c0_7 = arith.constant 0 : index
    %5 = vector.load %arg4[%c0_6, %c0_7] : memref<3x32xf32, #tpu.memory_space<vmem>>, vector<3x32xf32>
    %cst_8 = arith.constant dense<0.000000e+00> : vector<8x32xf32>
    %6 = tpu.matmul %4, %5, %cst_8 {dimension_numbers = #tpu.dot_dimension_numbers<[1], [0], [0], [1], [0, 0, 1, 1], [], []>} : vector<8x3xf32>, vector<3x32xf32>, vector<8x32xf32> -> vector<8x32xf32>
    %7 = vector.shape_cast %3 : vector<32x32xf32> to vector<8x4x32xf32>
    %8 = vector.shape_cast %6 : vector<8x32xf32> to vector<8x1x32xf32>
    %9 = vector.broadcast %8 : vector<8x1x32xf32> to vector<8x4x32xf32>
    %10 = arith.addf %7, %9 : vector<8x4x32xf32>
    %11 = vector.shape_cast %10 : vector<8x4x32xf32> to vector<32x32xf32>
    %c0_9 = arith.constant 0 : index
    %c0_10 = arith.constant 0 : index
    %12 = vector.load %arg5[%c0_9, %c0_10] : memref<1x32xf32, #tpu.memory_space<vmem>>, vector<1x32xf32>
    %13 = vector.broadcast %12 : vector<1x32xf32> to vector<32x32xf32>
    %14 = arith.addf %11, %13 : vector<32x32xf32>
    %cst_11 = arith.constant 0.000000e+00 : f32
    %15 = vector.broadcast %cst_11 : f32 to vector<32x32xf32>
    %16 = arith.maximumf %14, %15 : vector<32x32xf32>
    %c0_12 = arith.constant 0 : index
    %c0_13 = arith.constant 0 : index
    %17 = vector.load %arg6[%c0_12, %c0_13] : memref<32x32xf32, #tpu.memory_space<vmem>>, vector<32x32xf32>
    %cst_14 = arith.constant dense<0.000000e+00> : vector<32x32xf32>
    %18 = tpu.matmul %16, %17, %cst_14 {dimension_numbers = #tpu.dot_dimension_numbers<[1], [0], [0], [1], [0, 0, 1, 1], [], []>} : vector<32x32xf32>, vector<32x32xf32>, vector<32x32xf32> -> vector<32x32xf32>
    %c0_15 = arith.constant 0 : index
    %c0_16 = arith.constant 0 : index
    %19 = vector.load %arg7[%c0_15, %c0_16] : memref<1x32xf32, #tpu.memory_space<vmem>>, vector<1x32xf32>
    %20 = vector.broadcast %19 : vector<1x32xf32> to vector<32x32xf32>
    %21 = arith.addf %18, %20 : vector<32x32xf32>
    %cst_17 = arith.constant 0.000000e+00 : f32
    %22 = vector.broadcast %cst_17 : f32 to vector<32x32xf32>
    %23 = arith.maximumf %21, %22 : vector<32x32xf32>
    %c0_18 = arith.constant 0 : index
    %c0_19 = arith.constant 0 : index
    %24 = vector.load %arg8[%c0_18, %c0_19] : memref<32x16xf32, #tpu.memory_space<vmem>>, vector<32x16xf32>
    %cst_20 = arith.constant dense<0.000000e+00> : vector<32x16xf32>
    %25 = tpu.matmul %23, %24, %cst_20 {dimension_numbers = #tpu.dot_dimension_numbers<[1], [0], [0], [1], [0, 0, 1, 1], [], []>} : vector<32x32xf32>, vector<32x16xf32>, vector<32x16xf32> -> vector<32x16xf32>
    %c0_21 = arith.constant 0 : index
    %c0_22 = arith.constant 0 : index
    %26 = vector.load %arg9[%c0_21, %c0_22] : memref<1x16xf32, #tpu.memory_space<vmem>>, vector<1x16xf32>
    %27 = vector.broadcast %26 : vector<1x16xf32> to vector<32x16xf32>
    %28 = arith.addf %25, %27 : vector<32x16xf32>
    %29 = vector.shape_cast %28 : vector<32x16xf32> to vector<8x4x16xf32>
    %c0_23 = arith.constant 0 : index
    %c0_24 = arith.constant 0 : index
    %c0_25 = arith.constant 0 : index
    %30 = vector.load %arg10[%c0_23, %c0_24, %c0_25] : memref<8x4x16xf32, #tpu.memory_space<vmem>>, vector<8x4x16xf32>
    tpu.vector_store %arg10[%c0_23, %c0_24, %c0_25], %29 {strides = array<i32>} : memref<8x4x16xf32, #tpu.memory_space<vmem>>, vector<8x4x16xf32>,
    return
  }
  func.func @transform_0(%arg0: i32) -> (i32, i32, i32) {
    %c0_i32 = arith.constant 0 : i32
    %c0_i32_0 = arith.constant 0 : i32
    %c0_i32_1 = arith.constant 0 : i32
    return %arg0, %c0_i32, %c0_i32_0 : i32, i32, i32
  }
  func.func @transform_1(%arg0: i32) -> (i32, i32) {
    %c0_i32 = arith.constant 0 : i32
    %c0_i32_0 = arith.constant 0 : i32
    return %arg0, %c0_i32 : i32, i32
  }
  func.func @transform_2(%arg0: i32) -> (i32, i32) {
    %c0_i32 = arith.constant 0 : i32
    %c0_i32_0 = arith.constant 0 : i32
    %c0_i32_1 = arith.constant 0 : i32
    return %c0_i32, %c0_i32_0 : i32, i32
  }
  func.func @transform_3(%arg0: i32) -> (i32, i32) {
    %c0_i32 = arith.constant 0 : i32
    %c0_i32_0 = arith.constant 0 : i32
    %c0_i32_1 = arith.constant 0 : i32
    return %c0_i32, %c0_i32_0 : i32, i32
  }
  func.func @transform_4(%arg0: i32) -> (i32, i32) {
    %c0_i32 = arith.constant 0 : i32
    %c0_i32_0 = arith.constant 0 : i32
    %c0_i32_1 = arith.constant 0 : i32
    return %c0_i32, %c0_i32_0 : i32, i32
  }
  func.func @transform_5(%arg0: i32) -> (i32, i32) {
    %c0_i32 = arith.constant 0 : i32
    %c0_i32_0 = arith.constant 0 : i32
    %c0_i32_1 = arith.constant 0 : i32
    return %c0_i32, %c0_i32_0 : i32, i32
  }
  func.func @transform_6(%arg0: i32) -> (i32, i32) {
    %c0_i32 = arith.constant 0 : i32
    %c0_i32_0 = arith.constant 0 : i32
    %c0_i32_1 = arith.constant 0 : i32
    return %c0_i32, %c0_i32_0 : i32, i32
  }
  func.func @transform_7(%arg0: i32) -> (i32, i32) {
    %c0_i32 = arith.constant 0 : i32
    %c0_i32_0 = arith.constant 0 : i32
    %c0_i32_1 = arith.constant 0 : i32
    return %c0_i32, %c0_i32_0 : i32, i32
  }
  func.func @transform_8(%arg0: i32) -> (i32, i32) {
    %c0_i32 = arith.constant 0 : i32
    %c0_i32_0 = arith.constant 0 : i32
    %c0_i32_1 = arith.constant 0 : i32
    return %c0_i32, %c0_i32_0 : i32, i32
  }
  func.func @transform_9(%arg0: i32) -> (i32, i32, i32) {
    %c0_i32 = arith.constant 0 : i32
    %c0_i32_0 = arith.constant 0 : i32
    %c0_i32_1 = arith.constant 0 : i32
    return %arg0, %c0_i32, %c0_i32_0 : i32, i32, i32
  }
}

</mosaic_0001>

<llo_original>
// kernel: tpu_custom_call.1
$region0: #{tpu_custom_call.1}
  #allocation0 [shape = 'u32[]', space=smem, size = 0x4, offset = 0x4, fixed_abs, tag = 'smem constant byte address 0x4 - core index']
  #allocation1 [shape = 'u32[72,128]{1,0:T(1,128)}', space=vmem, size = 0x9000, scoped, tag = 'internal scratch']
  %s0 = inlined_call_operand.vmem [shape: f32[16,4,4], index: 0, kind: input, shape index: {}]
  %s1 = inlined_call_operand.vmem [shape: f32[16,3], index: 1, kind: input, shape index: {}]
  %s2 = inlined_call_operand.vmem [shape: f32[4,32], index: 2, kind: input, shape index: {}]
  %s3 = inlined_call_operand.vmem [shape: f32[3,32], index: 3, kind: input, shape index: {}]
  %s4 = inlined_call_operand.vmem [shape: f32[1,32], index: 4, kind: input, shape index: {}]
  %s5 = inlined_call_operand.vmem [shape: f32[32,32], index: 5, kind: input, shape index: {}]
  %s6 = inlined_call_operand.vmem [shape: f32[1,32], index: 6, kind: input, shape index: {}]
  %s7 = inlined_call_operand.vmem [shape: f32[32,16], index: 7, kind: input, shape index: {}]
  %s8 = inlined_call_operand.vmem [shape: f32[1,16], index: 8, kind: input, shape index: {}]
  %s9 = inlined_call_operand.hbm [shape: f32[16,4,16], index: 9, kind: output, shape index: {}]
  %s10 = sld [smem:[#allocation0]]
  $region69: #{tpu_custom_call.1} parent=0
    _
  %s12 = ssub.s32 1, %s10
  %s13 = scalar_select 0, %s12, %s10
  $region1: #{tpu_custom_call.1} parent=0
    #allocation2 [shape = 'u8[32768]{0}', space=vmem, size = 0x8000, scoped, tag = 'output window, operand 0']
    #allocation3 [shape = 's32[2]{0}', space=sflag, size = 0x8, scoped, tag = 'scoped memory for tpu_custom_call.1']
    %14 = vsyncpa [#allocation3], 0
    %s15 = scalar_lea.sflag [#allocation3], 1
    %16 = vsyncpa %s15, 0
    loop: start=0, step=1, limit=4
    $region2: #{tpu_custom_call.1} parent=1 // loop_pre_header
      _
    $region3: #{tpu_custom_call.1} parent=1 // loop_header
      %s18 = sphi 0, %s22
      %p19 = scmp.ge.s32.totalorder %s18, 4
      %s28 = sphi 0, %s30
      %s31 = sphi 0, %s28
      %s32 = sphi 0, %s31
      %s48 = sphi 0, %s32
      %s54 = sphi 0, %s56
      %s57 = sphi 0, %s54
      %s58 = sphi 0, %s57
      %s74 = sphi 0, %s58
      %s78 = sphi 0, %s78
      %s80 = sphi 0, %s78
      %s81 = sphi 0, %s80
      %s95 = sphi 0, %s81
      %s99 = sphi 0, %s99
      %s101 = sphi 0, %s99
      %s102 = sphi 0, %s101
      %s116 = sphi 0, %s102
      %s120 = sphi 0, %s120
      %s122 = sphi 0, %s120
      %s123 = sphi 0, %s122
      %s137 = sphi 0, %s123
      %s141 = sphi 0, %s141
      %s143 = sphi 0, %s141
      %s144 = sphi 0, %s143
      %s158 = sphi 0, %s144
      %s162 = sphi 0, %s162
      %s164 = sphi 0, %s162
      %s165 = sphi 0, %s164
      %s179 = sphi 0, %s165
      %s183 = sphi 0, %s183
      %s185 = sphi 0, %s183
      %s186 = sphi 0, %s185
      %s200 = sphi 0, %s186
      %s204 = sphi 0, %s204
      %s206 = sphi 0, %s204
      %s207 = sphi 0, %s206
      %s221 = sphi 0, %s207
      %s227 = sphi 0, %s229
      %s230 = sphi 0, %s227
      %s231 = sphi 0, %s230
      %s247 = sphi 0, %s231
    $region4: #{tpu_custom_call.1} parent=1 // loop_header_branch
      %21 = sbr.rel (%p19) target = $region8
    $region5: #{tpu_custom_call.1} parent=1 // loop_body
      %s23 = ssub.s32 %s18, 1
      %s24 = ssub.s32 %s18, 2
      %s25 = sadd.s32 %s18, 1
      %s26 = ssub.s32 %s18, %s25
      %p27 = scmp.eq.s32.totalorder %s26, 0
      %s29 = sadd.s32 %s28, 1
      %s30 = scalar_select %p27, %s28, %s29
      %p33 = pneg %p27
      %p34 = scmp.eq.s32.totalorder %s18, 1
      %p35 = por %p33, %p34
      %p36 = scmp.ne.s32.totalorder %s28, %s31
      %p37 = scmp.eq.s32.totalorder %s18, 0
      %p38 = por %p36, %p37
      %p39 = scmp.ne.s32.totalorder %s28, %s31
      %p40 = scmp.eq.s32.totalorder %s23, 1
      %p41 = por %p39, %p40
      %p42 = scmp.ne.s32.totalorder %s31, %s32
      %p43 = scmp.eq.s32.totalorder %s23, 0
      %p44 = por %p42, %p43
      %p45 = scmp.ne.s32.totalorder %s31, %s32
      %p46 = scmp.eq.s32.totalorder %s24, 1
      %p47 = por %p45, %p46
      %p49 = scmp.ne.s32.totalorder %s32, %s48
      %p50 = scmp.eq.s32.totalorder %s24, 0
      %p51 = por %p49, %p50
      %s52 = ssub.s32 %s18, %s25
      %p53 = scmp.eq.s32.totalorder %s52, 0
      %s55 = sadd.s32 %s54, 1
      %s56 = scalar_select %p53, %s54, %s55
      %p59 = pneg %p53
      %p60 = scmp.eq.s32.totalorder %s18, 1
      %p61 = por %p59, %p60
      %p62 = scmp.ne.s32.totalorder %s54, %s57
      %p63 = scmp.eq.s32.totalorder %s18, 0
      %p64 = por %p62, %p63
      %p65 = scmp.ne.s32.totalorder %s54, %s57
      %p66 = scmp.eq.s32.totalorder %s23, 1
      %p67 = por %p65, %p66
      %p68 = scmp.ne.s32.totalorder %s57, %s58
      %p69 = scmp.eq.s32.totalorder %s23, 0
      %p70 = por %p68, %p69
      %p71 = scmp.ne.s32.totalorder %s57, %s58
      %p72 = scmp.eq.s32.totalorder %s24, 1
      %p73 = por %p71, %p72
      %p75 = scmp.ne.s32.totalorder %s58, %s74
      %p76 = scmp.eq.s32.totalorder %s24, 0
      %p77 = por %p75, %p76
      %s79 = sadd.s32 %s78, 1
      %p82 = scmp.eq.s32.totalorder %s18, 1
      %p83 = scmp.ne.s32.totalorder %s78, %s80
      %p84 = scmp.eq.s32.totalorder %s18, 0
      %p85 = por %p83, %p84
      %p86 = scmp.ne.s32.totalorder %s78, %s80
      %p87 = scmp.eq.s32.totalorder %s23, 1
      %p88 = por %p86, %p87
      %p89 = scmp.ne.s32.totalorder %s80, %s81
      %p90 = scmp.eq.s32.totalorder %s23, 0
      %p91 = por %p89, %p90
      %p92 = scmp.ne.s32.totalorder %s80, %s81
      %p93 = scmp.eq.s32.totalorder %s24, 1
      %p94 = por %p92, %p93
      %p96 = scmp.ne.s32.totalorder %s81, %s95
      %p97 = scmp.eq.s32.totalorder %s24, 0
      %p98 = por %p96, %p97
      %s100 = sadd.s32 %s99, 1
      %p103 = scmp.eq.s32.totalorder %s18, 1
      %p104 = scmp.ne.s32.totalorder %s99, %s101
      %p105 = scmp.eq.s32.totalorder %s18, 0
      %p106 = por %p104, %p105
      %p107 = scmp.ne.s32.totalorder %s99, %s101
      %p108 = scmp.eq.s32.totalorder %s23, 1
      %p109 = por %p107, %p108
      %p110 = scmp.ne.s32.totalorder %s101, %s102
      %p111 = scmp.eq.s32.totalorder %s23, 0
      %p112 = por %p110, %p111
      %p113 = scmp.ne.s32.totalorder %s101, %s102
      %p114 = scmp.eq.s32.totalorder %s24, 1
      %p115 = por %p113, %p114
      %p117 = scmp.ne.s32.totalorder %s102, %s116
      %p118 = scmp.eq.s32.totalorder %s24, 0
      %p119 = por %p117, %p118
      %s121 = sadd.s32 %s120, 1
      %p124 = scmp.eq.s32.totalorder %s18, 1
      %p125 = scmp.ne.s32.totalorder %s120, %s122
      %p126 = scmp.eq.s32.totalorder %s18, 0
      %p127 = por %p125, %p126
      %p128 = scmp.ne.s32.totalorder %s120, %s122
      %p129 = scmp.eq.s32.totalorder %s23, 1
      %p130 = por %p128, %p129
      %p131 = scmp.ne.s32.totalorder %s122, %s123
      %p132 = scmp.eq.s32.totalorder %s23, 0
      %p133 = por %p131, %p132
      %p134 = scmp.ne.s32.totalorder %s122, %s123
      %p135 = scmp.eq.s32.totalorder %s24, 1
      %p136 = por %p134, %p135
      %p138 = scmp.ne.s32.totalorder %s123, %s137
      %p139 = scmp.eq.s32.totalorder %s24, 0
      %p140 = por %p138, %p139
      %s142 = sadd.s32 %s141, 1
      %p145 = scmp.eq.s32.totalorder %s18, 1
      %p146 = scmp.ne.s32.totalorder %s141, %s143
      %p147 = scmp.eq.s32.totalorder %s18, 0
      %p148 = por %p146, %p147
      %p149 = scmp.ne.s32.totalorder %s141, %s143
      %p150 = scmp.eq.s32.totalorder %s23, 1
      %p151 = por %p149, %p150
      %p152 = scmp.ne.s32.totalorder %s143, %s144
      %p153 = scmp.eq.s32.totalorder %s23, 0
      %p154 = por %p152, %p153
      %p155 = scmp.ne.s32.totalorder %s143, %s144
      %p156 = scmp.eq.s32.totalorder %s24, 1
      %p157 = por %p155, %p156
      %p159 = scmp.ne.s32.totalorder %s144, %s158
      %p160 = scmp.eq.s32.totalorder %s24, 0
      %p161 = por %p159, %p160
      %s163 = sadd.s32 %s162, 1
      %p166 = scmp.eq.s32.totalorder %s18, 1
      %p167 = scmp.ne.s32.totalorder %s162, %s164
      %p168 = scmp.eq.s32.totalorder %s18, 0
      %p169 = por %p167, %p168
      %p170 = scmp.ne.s32.totalorder %s162, %s164
      %p171 = scmp.eq.s32.totalorder %s23, 1
      %p172 = por %p170, %p171
      %p173 = scmp.ne.s32.totalorder %s164, %s165
      %p174 = scmp.eq.s32.totalorder %s23, 0
      %p175 = por %p173, %p174
      %p176 = scmp.ne.s32.totalorder %s164, %s165
      %p177 = scmp.eq.s32.totalorder %s24, 1
      %p178 = por %p176, %p177
      %p180 = scmp.ne.s32.totalorder %s165, %s179
      %p181 = scmp.eq.s32.totalorder %s24, 0
      %p182 = por %p180, %p181
      %s184 = sadd.s32 %s183, 1
      %p187 = scmp.eq.s32.totalorder %s18, 1
      %p188 = scmp.ne.s32.totalorder %s183, %s185
      %p189 = scmp.eq.s32.totalorder %s18, 0
      %p190 = por %p188, %p189
      %p191 = scmp.ne.s32.totalorder %s183, %s185
      %p192 = scmp.eq.s32.totalorder %s23, 1
      %p193 = por %p191, %p192
      %p194 = scmp.ne.s32.totalorder %s185, %s186
      %p195 = scmp.eq.s32.totalorder %s23, 0
      %p196 = por %p194, %p195
      %p197 = scmp.ne.s32.totalorder %s185, %s186
      %p198 = scmp.eq.s32.totalorder %s24, 1
      %p199 = por %p197, %p198
      %p201 = scmp.ne.s32.totalorder %s186, %s200
      %p202 = scmp.eq.s32.totalorder %s24, 0
      %p203 = por %p201, %p202
      %s205 = sadd.s32 %s204, 1
      %p208 = scmp.eq.s32.totalorder %s18, 1
      %p209 = scmp.ne.s32.totalorder %s204, %s206
      %p210 = scmp.eq.s32.totalorder %s18, 0
      %p211 = por %p209, %p210
      %p212 = scmp.ne.s32.totalorder %s204, %s206
      %p213 = scmp.eq.s32.totalorder %s23, 1
      %p214 = por %p212, %p213
      %p215 = scmp.ne.s32.totalorder %s206, %s207
      %p216 = scmp.eq.s32.totalorder %s23, 0
      %p217 = por %p215, %p216
      %p218 = scmp.ne.s32.totalorder %s206, %s207
      %p219 = scmp.eq.s32.totalorder %s24, 1
      %p220 = por %p218, %p219
      %p222 = scmp.ne.s32.totalorder %s207, %s221
      %p223 = scmp.eq.s32.totalorder %s24, 0
      %p224 = por %p222, %p223
      %s225 = ssub.s32 %s18, %s25
      %p226 = scmp.eq.s32.totalorder %s225, 0
      %s228 = sadd.s32 %s227, 1
      %s229 = scalar_select %p226, %s227, %s228
      %p232 = pneg %p226
      %p233 = scmp.eq.s32.totalorder %s18, 1
      %p234 = por %p232, %p233
      %p235 = scmp.ne.s32.totalorder %s227, %s230
      %p236 = scmp.eq.s32.totalorder %s18, 0
      %p237 = por %p235, %p236
      %p238 = scmp.ne.s32.totalorder %s227, %s230
      %p239 = scmp.eq.s32.totalorder %s23, 1
      %p240 = por %p238, %p239
      %p241 = scmp.ne.s32.totalorder %s230, %s231
      %p242 = scmp.eq.s32.totalorder %s23, 0
      %p243 = por %p241, %p242
      %p244 = scmp.ne.s32.totalorder %s230, %s231
      %p245 = scmp.eq.s32.totalorder %s24, 1
      %p246 = por %p244, %p245
      %p248 = scmp.ne.s32.totalorder %s231, %s247
      %p249 = scmp.eq.s32.totalorder %s24, 0
      %p250 = por %p248, %p249
      %p251 = scmp.le.s32.totalorder 1, %s18
      %p252 = scmp.lt.s32.totalorder %s18, 3
      %p253 = pnand %p251, %p252
      %p254 = pneg %p253
      // Predicated region
      $region9: #{tpu_custom_call.1} parent=5 // pred_check
        _
      $region10: #{tpu_custom_call.1} parent=5 // pred_check_branch
        %256 = sbr.rel (%p253) target = $region12
      $region11: #{tpu_custom_call.1} parent=5 // pred_region
        %s257 = ssub.s32 %s18, 1
        // Predicated region
        $region13: #{tpu_custom_call.1} parent=11 // pred_check
          %p258 = pneg %p91
        $region14: #{tpu_custom_call.1} parent=11 // pred_check_branch
          %260 = sbr.rel (%p258) target = $region16
        $region15: #{tpu_custom_call.1} parent=11 // pred_region
          _
        $region16: #{tpu_custom_call.1} parent=11 // pred_fallthru
          _
        // Predicated region
        $region17: #{tpu_custom_call.1} parent=11 // pred_check
          %p261 = pneg %p112
        $region18: #{tpu_custom_call.1} parent=11 // pred_check_branch
          %263 = sbr.rel (%p261) target = $region20
        $region19: #{tpu_custom_call.1} parent=11 // pred_region
          _
        $region20: #{tpu_custom_call.1} parent=11 // pred_fallthru
          _
        // Predicated region
        $region21: #{tpu_custom_call.1} parent=11 // pred_check
          %p264 = pneg %p133
        $region22: #{tpu_custom_call.1} parent=11 // pred_check_branch
          %266 = sbr.rel (%p264) target = $region24
        $region23: #{tpu_custom_call.1} parent=11 // pred_region
          _
        $region24: #{tpu_custom_call.1} parent=11 // pred_fallthru
          _
        // Predicated region
        $region25: #{tpu_custom_call.1} parent=11 // pred_check
          %p267 = pneg %p154
        $region26: #{tpu_custom_call.1} parent=11 // pred_check_branch
          %269 = sbr.rel (%p267) target = $region28
        $region27: #{tpu_custom_call.1} parent=11 // pred_region
          _
        $region28: #{tpu_custom_call.1} parent=11 // pred_fallthru
          _
        // Predicated region
        $region29: #{tpu_custom_call.1} parent=11 // pred_check
          %p270 = pneg %p175
        $region30: #{tpu_custom_call.1} parent=11 // pred_check_branch
          %272 = sbr.rel (%p270) target = $region32
        $region31: #{tpu_custom_call.1} parent=11 // pred_region
          _
        $region32: #{tpu_custom_call.1} parent=11 // pred_fallthru
          _
        // Predicated region
        $region33: #{tpu_custom_call.1} parent=11 // pred_check
          %p273 = pneg %p196
        $region34: #{tpu_custom_call.1} parent=11 // pred_check_branch
          %275 = sbr.rel (%p273) target = $region36
        $region35: #{tpu_custom_call.1} parent=11 // pred_region
          _
        $region36: #{tpu_custom_call.1} parent=11 // pred_fallthru
          _
        // Predicated region
        $region37: #{tpu_custom_call.1} parent=11 // pred_check
          %p276 = pneg %p217
        $region38: #{tpu_custom_call.1} parent=11 // pred_check_branch
          %278 = sbr.rel (%p276) target = $region40
        $region39: #{tpu_custom_call.1} parent=11 // pred_region
          _
        $region40: #{tpu_custom_call.1} parent=11 // pred_fallthru
          _
      $region12: #{tpu_custom_call.1} parent=5 // pred_fallthru
        _
      %p279 = scmp.lt.s32.totalorder %s18, 2
      // Predicated region
      $region41: #{tpu_custom_call.1} parent=5 // pred_check
        %p280 = pneg %p279
      $region42: #{tpu_custom_call.1} parent=5 // pred_check_branch
        %282 = sbr.rel (%p280) target = $region44
      $region43: #{tpu_custom_call.1} parent=5 // pred_region
        // Predicated region
        $region45: #{tpu_custom_call.1} parent=43 // pred_check
          %p283 = pneg %p38
        $region46: #{tpu_custom_call.1} parent=43 // pred_check_branch
          %285 = sbr.rel (%p283) target = $region48
        $region47: #{tpu_custom_call.1} parent=43 // pred_region
          %s286 = smul.u32 8, %s18
          %p287 = scmp.lt.s32.totalorder %s286, 15
          %s288 = scalar_select %p287, %s286, 15
          %s289 = smul.addr %s288, 4
          %s290 = scalar_lea.vmem %s0, %s289
          %s291 = smul.u32 8, %s18
        $region48: #{tpu_custom_call.1} parent=43 // pred_fallthru
          _
        // Predicated region
        $region49: #{tpu_custom_call.1} parent=43 // pred_check
          %p292 = pneg %p64
        $region50: #{tpu_custom_call.1} parent=43 // pred_check_branch
          %294 = sbr.rel (%p292) target = $region52
        $region51: #{tpu_custom_call.1} parent=43 // pred_region
          %p295 = scmp.lt.s32.totalorder %s18, 1
          %s296 = scalar_select %p295, %s18, 1
          %s297 = smul.addr %s296, 8
          %s298 = scalar_lea.vmem %s1, %s297
        $region52: #{tpu_custom_call.1} parent=43 // pred_fallthru
          _
      $region44: #{tpu_custom_call.1} parent=5 // pred_fallthru
        _
      %p299 = scmp.le.s32.totalorder 1, %s18
      %p300 = scmp.lt.s32.totalorder %s18, 3
      %p301 = pnand %p299, %p300
      %p302 = pneg %p301
      // Predicated region
      $region53: #{tpu_custom_call.1} parent=5 // pred_check
        _
      $region54: #{tpu_custom_call.1} parent=5 // pred_check_branch
        %304 = sbr.rel (%p301) target = $region56
      $region55: #{tpu_custom_call.1} parent=5 // pred_region
        %s305 = ssub.s32 %s18, 1
        %s306 = smul.u32 8, %s23
        %p307 = scmp.lt.s32.totalorder %s306, 15
        %s308 = scalar_select %p307, %s306, 15
        %s309 = smul.addr %s308, 4
        %s310 = scalar_lea.vmem %s0, %s309
        %p311 = pneg %p44
        %p312 = pneg %p41
        %p313 = scmp.lt.s32.totalorder %s23, 1
        %s314 = scalar_select %p313, %s23, 1
        %s315 = smul.addr %s314, 8
        %s316 = scalar_lea.vmem %s1, %s315
        %p317 = pneg %p70
        %p318 = pneg %p67
        %p319 = pneg %p91
        %p320 = pneg %p88
        %p321 = pneg %p112
        %p322 = pneg %p109
        %p323 = pneg %p133
        %p324 = pneg %p130
        %p325 = pneg %p154
        %p326 = pneg %p151
        %p327 = pneg %p175
        %p328 = pneg %p172
        %p329 = pneg %p196
        %p330 = pneg %p193
        %p331 = pneg %p217
        %p332 = pneg %p214
        %p333 = pneg %p243
        %p334 = pneg %p240
        %s335 = sand.u32 %s230, 1
        %s336 = scalar_lea.sflag [#allocation3], %s335
        %s337 = sand.u32 %s230, 1
        %s338 = smul.addr %s337, 32
        %s339 = scalar_lea.vmem [#allocation2], %s338
        %s340 = smul.u32 8, %s23
        %p341 = scmp.lt.s32.totalorder %s340, 15
        %s342 = scalar_select %p341, %s340, 15
        %s343 = smul.addr %s342, 4
        %s344 = scalar_lea.vmem %s0, %s343
        %s345 = smul.u32 8, %s23
        %p346 = scmp.lt.s32.totalorder %s23, 1
        %s347 = scalar_select %p346, %s23, 1
        %s348 = smul.addr %s347, 8
        %s349 = scalar_lea.vmem %s1, %s348
        %s350 = smul.u32 8, %s23
        %v351 = vld [vmem:[%s344] sm:$0xf]
        %v352 = vld [vmem:[%s344 + $0x4] sm:$0xf]
        %v353 = vld [vmem:[%s344 + $0x8] sm:$0xf]
        %v354 = vld [vmem:[%s344 + $0xc] sm:$0xf]
        %v355 = vld [vmem:[%s344 + $0x10] sm:$0xf]
        %v356 = vld [vmem:[%s344 + $0x14] sm:$0xf]
        %v357 = vld [vmem:[%s344 + $0x18] sm:$0xf]
        %v358 = vld [vmem:[%s344 + $0x1c] sm:$0xf]
        %v359 = vld [vmem:[%s2] sm:$0xf]
        %368 = vst [vmem:[#allocation1] ss:$2 sm:$0xff] %v351
        %s369 = scalar_lea.vmem [#allocation1], 1
        %370 = vst [vmem:[%s369] ss:$2 sm:$0xff] %v352
        %s371 = scalar_lea.vmem [#allocation1], 16
        %372 = vst [vmem:[%s371] ss:$2 sm:$0xff] %v353
        %s373 = scalar_lea.vmem [#allocation1], 17
        %374 = vst [vmem:[%s373] ss:$2 sm:$0xff] %v354
        %s375 = scalar_lea.vmem [#allocation1], 32
        %376 = vst [vmem:[%s375] ss:$2 sm:$0xff] %v355
        %s377 = scalar_lea.vmem [#allocation1], 33
        %378 = vst [vmem:[%s377] ss:$2 sm:$0xff] %v356
        %s379 = scalar_lea.vmem [#allocation1], 48
        %380 = vst [vmem:[%s379] ss:$2 sm:$0xff] %v357
        %s381 = scalar_lea.vmem [#allocation1], 49
        %382 = vst [vmem:[%s381] ss:$2 sm:$0xff] %v358
        %v383 = vld.sshfl [vmem:[#allocation1] sm:$0xff pattern:$0x75316420]
        %v384 = vld.sshfl [vmem:[#allocation1 + $0x10] sm:$0xff pattern:$0x75316420]
        %v385 = vld.sshfl [vmem:[#allocation1 + $0x20] sm:$0xff pattern:$0x75316420]
        %v386 = vld.sshfl [vmem:[#allocation1 + $0x30] sm:$0xff pattern:$0x75316420]
        %vm387 = vcmask 31744
        %v388 = vsel %vm387, %v383, 0
        %v390 = vsel %vm387, %v384, 0
        %v392 = vsel %vm387, %v385, 0
        %v394 = vsel %vm387, %v386, 0
        %vm396 = vcmask 1043456
        %v398 = vsel %vm396, %v359, 0
        %400 = vmatpush.msra.mxu0 0.0
        %401 = vmatpush.msra.mxu0 0.0
        %402 = vmatpush.msra.mxu0 0.0
        %403 = vmatpush.msra.mxu0 0.0
        %404 = vmatpush.msra.mxu0 0.0
        %405 = vmatpush.msra.mxu0 0.0
        %406 = vmatpush.msra.mxu0 0.0
        %407 = vmatpush.msra.mxu0 0.0
        %408 = vmatpush.msra.mxu0 0.0
        %409 = vmatpush.msra.mxu0 0.0
        %410 = vmatpush.msra.mxu0 0.0
        %411 = vmatpush.msra.mxu0 0.0
        %412 = vmatpush.msra.mxu0 0.0
        %413 = vmatpush.msra.mxu0 0.0
        %414 = vmatpush.msra.mxu0 0.0
        %415 = vmatpush.msra.mxu0 %v398
        %416 = vmatmul.f32.gmra.mxu0 %v388
        %v417 = vpop.f32.mrf.mxu0
        %v418 = vadd.f32 0.0, %v417
        %419 = vmatmul.f32.gmra.mxu0 %v390
        %v420 = vpop.f32.mrf.mxu0
        %v421 = vadd.f32 0.0, %v420
        %422 = vmatmul.f32.gmra.mxu0 %v392
        %v423 = vpop.f32.mrf.mxu0
        %v424 = vadd.f32 0.0, %v423
        %425 = vmatmul.f32.gmra.mxu0 %v394
        %v426 = vpop.f32.mrf.mxu0
        %v427 = vadd.f32 0.0, %v426
        %428 = vdwg.mxu0
        %v429 = vld [vmem:[%s349] sm:$0xff]
        %v430 = vld [vmem:[%s3] sm:$0x7]
        %vm431 = vcmask 23552
        %v433 = vsel %vm431, %v429, 0
        %vm435 = vcmask 1042432
        %v437 = vsel %vm435, %v430, 0
        %439 = vmatpush.msra.mxu0 0.0
        %440 = vmatpush.msra.mxu0 0.0
        %441 = vmatpush.msra.mxu0 0.0
        %442 = vmatpush.msra.mxu0 0.0
        %443 = vmatpush.msra.mxu0 0.0
        %444 = vmatpush.msra.mxu0 0.0
        %445 = vmatpush.msra.mxu0 0.0
        %446 = vmatpush.msra.mxu0 0.0
        %447 = vmatpush.msra.mxu0 0.0
        %448 = vmatpush.msra.mxu0 0.0
        %449 = vmatpush.msra.mxu0 0.0
        %450 = vmatpush.msra.mxu0 0.0
        %451 = vmatpush.msra.mxu0 0.0
        %452 = vmatpush.msra.mxu0 0.0
        %453 = vmatpush.msra.mxu0 0.0
        %454 = vmatpush.msra.mxu0 %v437
        %455 = vmatmul.f32.gmra.mxu0 %v433
        %v456 = vpop.f32.mrf.mxu0
        %v457 = vadd.f32 0.0, %v456
        %458 = vdwg.mxu0
        %v463 = vrot.slane %v418, 4
        %v464 = vrot.slane %v421, 4
        %v465 = vrot.slane %v424, 4
        %v466 = vrot.slane %v427, 4
        %v472 = vrot.slane %v457, 1
        %v473 = vrot.slane %v457, 2
        %v474 = vrot.slane %v457, 3
        %v475 = vrot.slane %v457, 4
        %v476 = vrot.slane %v457, 5
        %v477 = vrot.slane %v457, 6
        %v478 = vrot.slane %v457, 7
        %v479 = vperm.slane %v457, 0
        %v480 = vperm.slane %v472, 0
        %v481 = vperm.slane %v473, 0
        %v482 = vperm.slane %v474, 0
        %v483 = vperm.slane %v475, 0
        %v484 = vperm.slane %v476, 0
        %v485 = vperm.slane %v477, 0
        %v486 = vperm.slane %v478, 0
        %v495 = vadd.f32 %v418, %v479
        %v496 = vadd.f32 %v463, %v480
        %v497 = vadd.f32 %v421, %v481
        %v498 = vadd.f32 %v464, %v482
        %v499 = vadd.f32 %v424, %v483
        %v500 = vadd.f32 %v465, %v484
        %v501 = vadd.f32 %v427, %v485
        %v502 = vadd.f32 %v466, %v486
        %v503 = vld [vmem:[%s4] sm:$0x1]
        %v505 = vperm.slane %v503, 0
        %v507 = vrot.slane %v505, 4
        %v509 = vadd.f32 %v495, %v505
        %v510 = vadd.f32 %v496, %v507
        %v511 = vadd.f32 %v497, %v505
        %v512 = vadd.f32 %v498, %v507
        %v513 = vadd.f32 %v499, %v505
        %v514 = vadd.f32 %v500, %v507
        %v515 = vadd.f32 %v501, %v505
        %v516 = vadd.f32 %v502, %v507
        %v517 = vmax.f32 %v509, 0.0
        %v518 = vmax.f32 %v510, 0.0
        %v519 = vmax.f32 %v511, 0.0
        %v520 = vmax.f32 %v512, 0.0
        %v521 = vmax.f32 %v513, 0.0
        %v522 = vmax.f32 %v514, 0.0
        %v523 = vmax.f32 %v515, 0.0
        %v524 = vmax.f32 %v516, 0.0
        %v525 = vld [vmem:[%s5] sm:$0xff]
        %v526 = vld [vmem:[%s5 + $0x8] sm:$0xff]
        %v527 = vld [vmem:[%s5 + $0x10] sm:$0xff]
        %v528 = vld [vmem:[%s5 + $0x18] sm:$0xff]
        %v529 = vld [vmem:[%s6] sm:$0x1]
        %v531 = vperm.slane %v529, 0
        %541 = vst [vmem:[#allocation1] ss:$2 sm:$0xff] %v517
        %s542 = scalar_lea.vmem [#allocation1], 1
        %543 = vst [vmem:[%s542] ss:$2 sm:$0xff] %v518
        %s544 = scalar_lea.vmem [#allocation1], 16
        %545 = vst [vmem:[%s544] ss:$2 sm:$0xff] %v519
        %s546 = scalar_lea.vmem [#allocation1], 17
        %547 = vst [vmem:[%s546] ss:$2 sm:$0xff] %v520
        %s548 = scalar_lea.vmem [#allocation1], 32
        %549 = vst [vmem:[%s548] ss:$2 sm:$0xff] %v521
        %s550 = scalar_lea.vmem [#allocation1], 33
        %551 = vst [vmem:[%s550] ss:$2 sm:$0xff] %v522
        %s552 = scalar_lea.vmem [#allocation1], 48
        %553 = vst [vmem:[%s552] ss:$2 sm:$0xff] %v523
        %s554 = scalar_lea.vmem [#allocation1], 49
        %555 = vst [vmem:[%s554] ss:$2 sm:$0xff] %v524
        %v556 = vld.sshfl [vmem:[#allocation1] sm:$0xff pattern:$0x75316420]
        %v557 = vld.sshfl [vmem:[#allocation1 + $0x10] sm:$0xff pattern:$0x75316420]
        %v558 = vld.sshfl [vmem:[#allocation1 + $0x20] sm:$0xff pattern:$0x75316420]
        %v559 = vld.sshfl [vmem:[#allocation1 + $0x30] sm:$0xff pattern:$0x75316420]
        %vm560 = vcmask 261120
        %v561 = vsel %vm560, %v556, 0
        %v563 = vsel %vm560, %v557, 0
        %v565 = vsel %vm560, %v558, 0
        %v567 = vsel %vm560, %v559, 0
        %569 = vmatpush.msra.mxu0 0.0
        %570 = vmatpush.msra.mxu0 0.0
        %571 = vmatpush.msra.mxu0 0.0
        %572 = vmatpush.msra.mxu0 0.0
        %573 = vmatpush.msra.mxu0 0.0
        %574 = vmatpush.msra.mxu0 0.0
        %575 = vmatpush.msra.mxu0 0.0
        %576 = vmatpush.msra.mxu0 0.0
        %577 = vmatpush.msra.mxu0 0.0
        %578 = vmatpush.msra.mxu0 0.0
        %579 = vmatpush.msra.mxu0 0.0
        %580 = vmatpush.msra.mxu0 0.0
        %581 = vmatpush.msra.mxu0 %v528
        %582 = vmatpush.msra.mxu0 %v527
        %583 = vmatpush.msra.mxu0 %v526
        %584 = vmatpush.msra.mxu0 %v525
        %585 = vmatmul.f32.gmra.mxu0 %v561
        %v586 = vpop.f32.mrf.mxu0
        %v587 = vadd.f32 %v531, %v586
        %588 = vmatmul.f32.gmra.mxu0 %v563
        %v589 = vpop.f32.mrf.mxu0
        %v590 = vadd.f32 %v531, %v589
        %591 = vmatmul.f32.gmra.mxu0 %v565
        %v592 = vpop.f32.mrf.mxu0
        %v593 = vadd.f32 %v531, %v592
        %594 = vmatmul.f32.gmra.mxu0 %v567
        %v595 = vpop.f32.mrf.mxu0
        %v596 = vadd.f32 %v531, %v595
        %597 = vdwg.mxu0
        %v598 = vmax.f32 %v587, 0.0
        %v599 = vmax.f32 %v590, 0.0
        %v600 = vmax.f32 %v593, 0.0
        %v601 = vmax.f32 %v596, 0.0
        %v602 = vld [vmem:[%s7] sm:$0xff]
        %v603 = vld [vmem:[%s7 + $0x8] sm:$0xff]
        %v604 = vld [vmem:[%s7 + $0x10] sm:$0xff]
        %v605 = vld [vmem:[%s7 + $0x18] sm:$0xff]
        %v606 = vld [vmem:[%s8] sm:$0x1]
        %v608 = vperm.slane %v606, 0
        %v611 = vsel %vm560, %v598, 0
        %v614 = vsel %vm560, %v599, 0
        %v617 = vsel %vm560, %v600, 0
        %v620 = vsel %vm560, %v601, 0
        %622 = vmatpush.msra.mxu0 0.0
        %623 = vmatpush.msra.mxu0 0.0
        %624 = vmatpush.msra.mxu0 0.0
        %625 = vmatpush.msra.mxu0 0.0
        %626 = vmatpush.msra.mxu0 0.0
        %627 = vmatpush.msra.mxu0 0.0
        %628 = vmatpush.msra.mxu0 0.0
        %629 = vmatpush.msra.mxu0 0.0
        %630 = vmatpush.msra.mxu0 0.0
        %631 = vmatpush.msra.mxu0 0.0
        %632 = vmatpush.msra.mxu0 0.0
        %633 = vmatpush.msra.mxu0 0.0
        %634 = vmatpush.msra.mxu0 %v605
        %635 = vmatpush.msra.mxu0 %v604
        %636 = vmatpush.msra.mxu0 %v603
        %637 = vmatpush.msra.mxu0 %v602
        %638 = vmatmul.f32.gmra.mxu0 %v611
        %v639 = vpop.f32.mrf.mxu0
        %v640 = vadd.f32 %v608, %v639
        %641 = vmatmul.f32.gmra.mxu0 %v614
        %v642 = vpop.f32.mrf.mxu0
        %v643 = vadd.f32 %v608, %v642
        %644 = vmatmul.f32.gmra.mxu0 %v617
        %v645 = vpop.f32.mrf.mxu0
        %v646 = vadd.f32 %v608, %v645
        %647 = vmatmul.f32.gmra.mxu0 %v620
        %v648 = vpop.f32.mrf.mxu0
        %v649 = vadd.f32 %v608, %v648
        %650 = vdwg.mxu0
        %v655 = vrot.slane %v640, 4
        %v656 = vrot.slane %v643, 4
        %v657 = vrot.slane %v646, 4
        %v658 = vrot.slane %v649, 4
        %vm663 = vcmask 125952
        %664 = vst.msk [vmem:[%s339] sm:$0xf] %vm663, %v640
        %665 = vst.msk [vmem:[%s339 + $0x4] sm:$0xf] %vm663, %v655
        %666 = vst.msk [vmem:[%s339 + $0x8] sm:$0xf] %vm663, %v643
        %667 = vst.msk [vmem:[%s339 + $0xc] sm:$0xf] %vm663, %v656
        %668 = vst.msk [vmem:[%s339 + $0x10] sm:$0xf] %vm663, %v646
        %669 = vst.msk [vmem:[%s339 + $0x14] sm:$0xf] %vm663, %v657
        %670 = vst.msk [vmem:[%s339 + $0x18] sm:$0xf] %vm663, %v649
        %671 = vst.msk [vmem:[%s339 + $0x1c] sm:$0xf] %vm663, %v658
        %s672 = sand.u32 %s230, 1
        %s673 = scalar_lea.sflag [#allocation3], %s672
        %s674 = sand.u32 %s230, 1
        %s675 = smul.addr %s674, 32
        %s676 = scalar_lea.vmem [#allocation2], %s675
        // Predicated region
        $region57: #{tpu_custom_call.1} parent=55 // pred_check
          %p677 = pneg %p240
        $region58: #{tpu_custom_call.1} parent=55 // pred_check_branch
          %679 = sbr.rel (%p677) target = $region60
        $region59: #{tpu_custom_call.1} parent=55 // pred_region
          %s680 = smul.u32 8, %s23
          %682 = vsyncadd %s673, 0
          %s683 = smul.addr %s680, 4
          %s684 = scalar_lea.hbm %s9, %s683
          %s685 = sshll.u32 %s676, 4
          %s686 = int_to_ptr.vmem [resolvable:$true] %s685
          %s687 = sshll.u32 %s684, 4
          %s688 = int_to_ptr.hbm [resolvable:$true] %s687
          %693 = dma.vmem_to_hbm [thread:$0]  %s686, 512, %s688, %s673, 64, 64, 4
        $region60: #{tpu_custom_call.1} parent=55 // pred_fallthru
          _
      $region56: #{tpu_custom_call.1} parent=5 // pred_fallthru
        _
      %p694 = scmp.le.s32.totalorder 2, %s18
      // Predicated region
      $region61: #{tpu_custom_call.1} parent=5 // pred_check
        %p695 = pneg %p694
      $region62: #{tpu_custom_call.1} parent=5 // pred_check_branch
        %697 = sbr.rel (%p695) target = $region64
      $region63: #{tpu_custom_call.1} parent=5 // pred_region
        %s698 = ssub.s32 %s18, 2
        // Predicated region
        $region65: #{tpu_custom_call.1} parent=63 // pred_check
          %p699 = pneg %p246
        $region66: #{tpu_custom_call.1} parent=63 // pred_check_branch
          %701 = sbr.rel (%p699) target = $region68
        $region67: #{tpu_custom_call.1} parent=63 // pred_region
          %s702 = sand.u32 %s231, 1
          %s703 = scalar_lea.sflag [#allocation3], %s702
          %s704 = sand.u32 %s231, 1
          %s705 = smul.addr %s704, 32
          %s706 = scalar_lea.vmem [#allocation2], %s705
          %708 = dma.done %s703, 512
        $region68: #{tpu_custom_call.1} parent=63 // pred_fallthru
          _
      $region64: #{tpu_custom_call.1} parent=5 // pred_fallthru
        _
    $region6: #{tpu_custom_call.1} parent=1 // loop_footer
      %s22 = sadd.s32 1, %s18
    $region7: #{tpu_custom_call.1} parent=1 // loop_footer_branch
      %17 = sbr.rel target = $region3
    $region8: #{tpu_custom_call.1} parent=1 // loop_exit
      _
    %709 = vsyncpa [#allocation3], 1
    %s710 = scalar_lea.sflag [#allocation3], 1
    %711 = vsyncpa %s710, 1

</llo_original>
